<compile_context>
chip_gen: v6e
topology: v6e:2x2x1
jax: 0.10.0
libtpu: 0.0.40
codegen_flags: <defaults>
</compile_context>

<pallas_src>
import functools

import jax
import jax.numpy as jnp
from jax.experimental import pallas as pl
from jax.experimental.pallas import tpu as pltpu

_SQRT2 = 1.4142135623730951


# ---------------------------------------------------------------------------
# Pallas kernel: fused complex batch-norm (stats + whitening + affine)
# ---------------------------------------------------------------------------
def _cbn_kernel(r_ref, i_ref, grr_ref, gri_ref, gii_ref, br_ref, bi_ref,
                or_ref, oi_ref, stats_ref, *, inv_count, epsilon):
    r = r_ref[...]              # (N, C, HW) f32
    im = i_ref[...]

    # Per-channel mean over batch & spatial: lane reduce, then batch reduce.
    def _chan_mean(x):
        s = jnp.sum(x, axis=2, keepdims=True)                  # (N, C, 1)
        return jnp.sum(s, axis=0, keepdims=True) * inv_count   # (1, C, 1)

    mu_r = _chan_mean(r)
    mu_i = _chan_mean(im)
    rc = r - mu_r
    ic = im - mu_i

    vrr = _chan_mean(rc * rc) + epsilon
    vri = _chan_mean(rc * ic)
    vii = _chan_mean(ic * ic) + epsilon

    # 2x2 inverse matrix square root of the per-channel covariance.
    tau = vrr + vii
    delta = vrr * vii - vri * vri
    s = jnp.sqrt(delta)
    t = jnp.sqrt(tau + 2.0 * s)
    inv_st = 1.0 / (_SQRT2 * s * t)
    wrr = (vii + s) * inv_st
    wii = (vrr + s) * inv_st
    wri = -vri * inv_st

    real_n = wrr * rc + wri * ic
    imag_n = wri * rc + wii * ic

    grr = grr_ref[...]          # (1, C, 1)
    gri = gri_ref[...]
    gii = gii_ref[...]
    br = br_ref[...]
    bi = bi_ref[...]

    or_ref[...] = (real_n * grr + imag_n * gri + br).astype(or_ref.dtype)
    oi_ref[...] = (real_n * gri + imag_n * gii + bi).astype(oi_ref.dtype)

    # Batch statistics for the running-buffer update (tiny side output).
    stats_ref[...] = jnp.concatenate([mu_r, mu_i, vrr, vri, vii], axis=0)


# ---------------------------------------------------------------------------
# Wrapper: training-mode forward of C_BatchNorm2d
# ---------------------------------------------------------------------------
@functools.partial(jax.jit, static_argnames=("epsilon", "momentum"))
def c_batchnorm2d_train(x_real, x_imag,
                        gamma_rr, gamma_ri, gamma_ii, bias_real, bias_imag,
                        running_mean_real, running_mean_imag,
                        running_Vrr, running_Vri, running_Vii,
                        *, epsilon=1e-4, momentum=0.1):
    N, C, H, W = x_real.shape
    HW = H * W

    # Free reshapes only (contiguous NCHW -> (N, C, H*W)); no transposes.
    r3 = x_real.reshape(N, C, HW).astype(jnp.float32)
    i3 = x_imag.reshape(N, C, HW).astype(jnp.float32)
    chan = lambda p: p.reshape(1, C, 1).astype(jnp.float32)

    data_spec = pl.BlockSpec((N, C, HW), lambda i: (0, 0, 0))
    par_spec = pl.BlockSpec((1, C, 1), lambda i: (0, 0, 0))
    stats_spec = pl.BlockSpec((5, C, 1), lambda i: (0, 0, 0))

    kernel = functools.partial(
        _cbn_kernel, inv_count=1.0 / float(N * HW), epsilon=float(epsilon))

    cost = pl.CostEstimate(
        flops=40 * N * C * HW,
        transcendentals=2 * C,
        bytes_accessed=4 * (4 * N * C * HW + 10 * C),
    )

    out_r, out_i, stats = pl.pallas_call(
        kernel,
        out_shape=(
            jax.ShapeDtypeStruct((N, C, HW), jnp.float32),
            jax.ShapeDtypeStruct((N, C, HW), jnp.float32),
            jax.ShapeDtypeStruct((5, C, 1), jnp.float32),
        ),
        grid=(1,),
        in_specs=[data_spec, data_spec,
                  par_spec, par_spec, par_spec, par_spec, par_spec],
        out_specs=(data_spec, data_spec, stats_spec),
        compiler_params=pltpu.CompilerParams(
            dimension_semantics=("arbitrary",)),
        cost_estimate=cost,
    )(r3, i3, chan(gamma_rr), chan(gamma_ri), chan(gamma_ii),
      chan(bias_real), chan(bias_imag))

    out_r = out_r.reshape(N, C, H, W)
    out_i = out_i.reshape(N, C, H, W)

    stats = stats.reshape(5, C)
    mu_r, mu_i, vrr, vri, vii = stats[0], stats[1], stats[2], stats[3], stats[4]

    # Running-stat update, matching the module's (reversed) momentum rule:
    #   running = running * momentum + (1 - momentum) * batch
    upd = lambda run, batch: run * momentum + (1.0 - momentum) * batch
    new_running = {
        "running_mean_real": upd(running_mean_real, mu_r),
        "running_mean_imag": upd(running_mean_imag, mu_i),
        "running_Vrr": upd(running_Vrr, vrr),
        "running_Vri": upd(running_Vri, vri),
        "running_Vii": upd(running_Vii, vii),
    }
    # TODO(synk): eval-mode path (training=False) reuses the same whitening
    # math but feeds running_{mean,V*} instead of batch statistics; the
    # num_batches_tracked += 1 counter and the `check` debug prints are
    # host-side bookkeeping and are not part of the kernel.
    return out_r, out_i, new_running


# ---------------------------------------------------------------------------
# Pure-JAX reference (same math as the PyTorch module) for sanity checking
# ---------------------------------------------------------------------------
def _reference(x_real, x_imag, grr, gri, gii, br, bi, eps):
    axes = (0, 2, 3)
    b = lambda v: v[None, :, None, None]
    mu_r = jnp.mean(x_real, axis=axes)
    mu_i = jnp.mean(x_imag, axis=axes)
    rc = x_real - b(mu_r)
    ic = x_imag - b(mu_i)
    vrr = jnp.mean(rc * rc, axis=axes) + eps
    vri = jnp.mean(rc * ic, axis=axes)
    vii = jnp.mean(ic * ic, axis=axes) + eps
    tau = vrr + vii
    delta = vrr * vii - vri * vri
    s = jnp.sqrt(delta)
    t = jnp.sqrt(tau + 2.0 * s)
    inv_st = 1.0 / (_SQRT2 * s * t)
    wrr = (vii + s) * inv_st
    wii = (vrr + s) * inv_st
    wri = -vri * inv_st
    rn = b(wrr) * rc + b(wri) * ic
    inm = b(wri) * rc + b(wii) * ic
    ans_r = rn * b(grr) + inm * b(gri) + b(br)
    ans_i = rn * b(gri) + inm * b(gii) + b(bi)
    return ans_r, ans_i, (mu_r, mu_i, vrr, vri, vii)


if __name__ == "__main__":
    # Module config: C_BatchNorm2d(num_features=4), input (N=2, C=4, H=W=16).
    N, C, H, W = 2, 4, 16, 16
    eps, momentum = 1e-4, 0.1

    key = jax.random.PRNGKey(0)
    k = jax.random.split(key, 7)
    x_real = jax.random.normal(k[0], (N, C, H, W), dtype=jnp.float32)
    x_imag = 0.7 * jax.random.normal(k[1], (N, C, H, W), dtype=jnp.float32) + 0.25

    g0 = 0.7071067811865476  # sqrt(0.5), the module's init value
    gamma_rr = g0 + 0.05 * jax.random.normal(k[2], (C,), dtype=jnp.float32)
    gamma_ri = 0.05 * jax.random.normal(k[3], (C,), dtype=jnp.float32)
    gamma_ii = g0 + 0.05 * jax.random.normal(k[4], (C,), dtype=jnp.float32)
    bias_real = 0.1 * jax.random.normal(k[5], (C,), dtype=jnp.float32)
    bias_imag = 0.1 * jax.random.normal(k[6], (C,), dtype=jnp.float32)

    running_mean_real = jnp.zeros((C,), jnp.float32)
    running_mean_imag = jnp.zeros((C,), jnp.float32)
    running_Vrr = jnp.full((C,), 1.0 / _SQRT2, jnp.float32)
    running_Vii = jnp.full((C,), 1.0 / _SQRT2, jnp.float32)
    running_Vri = jnp.zeros((C,), jnp.float32)

    out_r, out_i, new_running = c_batchnorm2d_train(
        x_real, x_imag, gamma_rr, gamma_ri, gamma_ii, bias_real, bias_imag,
        running_mean_real, running_mean_imag, running_Vrr, running_Vri,
        running_Vii, epsilon=eps, momentum=momentum)
    jax.block_until_ready((out_r, out_i, new_running))

    # Sanity check against a pure-JAX reference of the module's math.
    ref_r, ref_i, (mu_r, mu_i, vrr, vri, vii) = _reference(
        x_real, x_imag, gamma_rr, gamma_ri, gamma_ii, bias_real, bias_imag, eps)
    assert out_r.shape == (N, C, H, W) and out_i.shape == (N, C, H, W)
    assert jnp.allclose(out_r, ref_r, atol=1e-4, rtol=1e-4)
    assert jnp.allclose(out_i, ref_i, atol=1e-4, rtol=1e-4)
    ref_run_Vrr = running_Vrr * momentum + (1.0 - momentum) * vrr
    assert jnp.allclose(new_running["running_Vrr"], ref_run_Vrr,
                        atol=1e-5, rtol=1e-5)
    print("KERNEL_OK")
</pallas_src>

<mosaic_0001>
module attributes {stable_mosaic.version = 11 : i64} {
  func.func @_cbn_kernel(%arg0: i32, %arg1: memref<2x4x256xf32, #tpu.memory_space<vmem>>, %arg2: memref<2x4x256xf32, #tpu.memory_space<vmem>>, %arg3: memref<1x4x1xf32, #tpu.memory_space<vmem>>, %arg4: memref<1x4x1xf32, #tpu.memory_space<vmem>>, %arg5: memref<1x4x1xf32, #tpu.memory_space<vmem>>, %arg6: memref<1x4x1xf32, #tpu.memory_space<vmem>>, %arg7: memref<1x4x1xf32, #tpu.memory_space<vmem>>, %arg8: memref<2x4x256xf32, #tpu.memory_space<vmem>>, %arg9: memref<2x4x256xf32, #tpu.memory_space<vmem>>, %arg10: memref<5x4x1xf32, #tpu.memory_space<vmem>>) attributes {dimension_semantics = [#tpu.dimension_semantics<arbitrary>], iteration_bounds = array<i64: 1>, scalar_prefetch = 0 : i64, scratch_operands = 0 : i64, tpu.core_type = #tpu.core_type<tc>, window_params = [{pipeline_mode = #tpu.pipeline_mode<synchronous>, transform_indices = @transform_0, window_bounds = array<i64: 2, 4, 256>}, {pipeline_mode = #tpu.pipeline_mode<synchronous>, transform_indices = @transform_1, window_bounds = array<i64: 2, 4, 256>}, {pipeline_mode = #tpu.pipeline_mode<synchronous>, transform_indices = @transform_2, window_bounds = array<i64: 1, 4, 1>}, {pipeline_mode = #tpu.pipeline_mode<synchronous>, transform_indices = @transform_3, window_bounds = array<i64: 1, 4, 1>}, {pipeline_mode = #tpu.pipeline_mode<synchronous>, transform_indices = @transform_4, window_bounds = array<i64: 1, 4, 1>}, {pipeline_mode = #tpu.pipeline_mode<synchronous>, transform_indices = @transform_5, window_bounds = array<i64: 1, 4, 1>}, {pipeline_mode = #tpu.pipeline_mode<synchronous>, transform_indices = @transform_6, window_bounds = array<i64: 1, 4, 1>}, {pipeline_mode = #tpu.pipeline_mode<synchronous>, transform_indices = @transform_7, window_bounds = array<i64: 2, 4, 256>}, {pipeline_mode = #tpu.pipeline_mode<synchronous>, transform_indices = @transform_8, window_bounds = array<i64: 2, 4, 256>}, {pipeline_mode = #tpu.pipeline_mode<synchronous>, transform_indices = @transform_9, window_bounds = array<i64: 5, 4, 1>}]} {
    %c0 = arith.constant 0 : index
    %c0_0 = arith.constant 0 : index
    %c0_1 = arith.constant 0 : index
    %0 = vector.load %arg1[%c0, %c0_0, %c0_1] : memref<2x4x256xf32, #tpu.memory_space<vmem>>, vector<2x4x256xf32>
    %c0_2 = arith.constant 0 : index
    %c0_3 = arith.constant 0 : index
    %c0_4 = arith.constant 0 : index
    %1 = vector.load %arg2[%c0_2, %c0_3, %c0_4] : memref<2x4x256xf32, #tpu.memory_space<vmem>>, vector<2x4x256xf32>
    %cst = arith.constant dense<0.000000e+00> : vector<2x4xf32>
    %2 = vector.multi_reduction <add>, %0, %cst [2] : vector<2x4x256xf32> to vector<2x4xf32>
    %3 = vector.shape_cast %2 : vector<2x4xf32> to vector<2x4x1xf32>
    %cst_5 = arith.constant dense<0.000000e+00> : vector<4x1xf32>
    %4 = vector.multi_reduction <add>, %3, %cst_5 [0] : vector<2x4x1xf32> to vector<4x1xf32>
    %5 = vector.shape_cast %4 : vector<4x1xf32> to vector<1x4x1xf32>
    %cst_6 = arith.constant 0.001953125 : f32
    %6 = vector.broadcast %cst_6 : f32 to vector<1x4x1xf32>
    %7 = arith.mulf %5, %6 : vector<1x4x1xf32>
    %cst_7 = arith.constant dense<0.000000e+00> : vector<2x4xf32>
    %8 = vector.multi_reduction <add>, %1, %cst_7 [2] : vector<2x4x256xf32> to vector<2x4xf32>
    %9 = vector.shape_cast %8 : vector<2x4xf32> to vector<2x4x1xf32>
    %cst_8 = arith.constant dense<0.000000e+00> : vector<4x1xf32>
    %10 = vector.multi_reduction <add>, %9, %cst_8 [0] : vector<2x4x1xf32> to vector<4x1xf32>
    %11 = vector.shape_cast %10 : vector<4x1xf32> to vector<1x4x1xf32>
    %cst_9 = arith.constant 0.001953125 : f32
    %12 = vector.broadcast %cst_9 : f32 to vector<1x4x1xf32>
    %13 = arith.mulf %11, %12 : vector<1x4x1xf32>
    %14 = vector.broadcast %7 : vector<1x4x1xf32> to vector<2x4x256xf32>
    %15 = arith.subf %0, %14 : vector<2x4x256xf32>
    %16 = vector.broadcast %13 : vector<1x4x1xf32> to vector<2x4x256xf32>
    %17 = arith.subf %1, %16 : vector<2x4x256xf32>
    %18 = arith.mulf %15, %15 : vector<2x4x256xf32>
    %cst_10 = arith.constant dense<0.000000e+00> : vector<2x4xf32>
    %19 = vector.multi_reduction <add>, %18, %cst_10 [2] : vector<2x4x256xf32> to vector<2x4xf32>
    %20 = vector.shape_cast %19 : vector<2x4xf32> to vector<2x4x1xf32>
    %cst_11 = arith.constant dense<0.000000e+00> : vector<4x1xf32>
    %21 = vector.multi_reduction <add>, %20, %cst_11 [0] : vector<2x4x1xf32> to vector<4x1xf32>
    %22 = vector.shape_cast %21 : vector<4x1xf32> to vector<1x4x1xf32>
    %cst_12 = arith.constant 0.001953125 : f32
    %23 = vector.broadcast %cst_12 : f32 to vector<1x4x1xf32>
    %24 = arith.mulf %22, %23 : vector<1x4x1xf32>
    %cst_13 = arith.constant 9.99999974E-5 : f32
    %25 = vector.broadcast %cst_13 : f32 to vector<1x4x1xf32>
    %26 = arith.addf %24, %25 : vector<1x4x1xf32>
    %27 = arith.mulf %15, %17 : vector<2x4x256xf32>
    %cst_14 = arith.constant dense<0.000000e+00> : vector<2x4xf32>
    %28 = vector.multi_reduction <add>, %27, %cst_14 [2] : vector<2x4x256xf32> to vector<2x4xf32>
    %29 = vector.shape_cast %28 : vector<2x4xf32> to vector<2x4x1xf32>
    %cst_15 = arith.constant dense<0.000000e+00> : vector<4x1xf32>
    %30 = vector.multi_reduction <add>, %29, %cst_15 [0] : vector<2x4x1xf32> to vector<4x1xf32>
    %31 = vector.shape_cast %30 : vector<4x1xf32> to vector<1x4x1xf32>
    %cst_16 = arith.constant 0.001953125 : f32
    %32 = vector.broadcast %cst_16 : f32 to vector<1x4x1xf32>
    %33 = arith.mulf %31, %32 : vector<1x4x1xf32>
    %34 = arith.mulf %17, %17 : vector<2x4x256xf32>
    %cst_17 = arith.constant dense<0.000000e+00> : vector<2x4xf32>
    %35 = vector.multi_reduction <add>, %34, %cst_17 [2] : vector<2x4x256xf32> to vector<2x4xf32>
    %36 = vector.shape_cast %35 : vector<2x4xf32> to vector<2x4x1xf32>
    %cst_18 = arith.constant dense<0.000000e+00> : vector<4x1xf32>
    %37 = vector.multi_reduction <add>, %36, %cst_18 [0] : vector<2x4x1xf32> to vector<4x1xf32>
    %38 = vector.shape_cast %37 : vector<4x1xf32> to vector<1x4x1xf32>
    %cst_19 = arith.constant 0.001953125 : f32
    %39 = vector.broadcast %cst_19 : f32 to vector<1x4x1xf32>
    %40 = arith.mulf %38, %39 : vector<1x4x1xf32>
    %cst_20 = arith.constant 9.99999974E-5 : f32
    %41 = vector.broadcast %cst_20 : f32 to vector<1x4x1xf32>
    %42 = arith.addf %40, %41 : vector<1x4x1xf32>
    %43 = arith.addf %26, %42 : vector<1x4x1xf32>
    %44 = arith.mulf %26, %42 : vector<1x4x1xf32>
    %45 = arith.mulf %33, %33 : vector<1x4x1xf32>
    %46 = arith.subf %44, %45 : vector<1x4x1xf32>
    %47 = math.sqrt %46 : vector<1x4x1xf32>
    %cst_21 = arith.constant 2.000000e+00 : f32
    %48 = vector.broadcast %cst_21 : f32 to vector<1x4x1xf32>
    %49 = arith.mulf %48, %47 : vector<1x4x1xf32>
    %50 = arith.addf %43, %49 : vector<1x4x1xf32>
    %51 = math.sqrt %50 : vector<1x4x1xf32>
    %cst_22 = arith.constant 1.41421354 : f32
    %52 = vector.broadcast %cst_22 : f32 to vector<1x4x1xf32>
    %53 = arith.mulf %52, %47 : vector<1x4x1xf32>
    %54 = arith.mulf %53, %51 : vector<1x4x1xf32>
    %cst_23 = arith.constant 1.000000e+00 : f32
    %55 = vector.broadcast %cst_23 : f32 to vector<1x4x1xf32>
    %56 = arith.divf %55, %54 : vector<1x4x1xf32>
    %57 = arith.addf %42, %47 : vector<1x4x1xf32>
    %58 = arith.mulf %57, %56 : vector<1x4x1xf32>
    %59 = arith.addf %26, %47 : vector<1x4x1xf32>
    %60 = arith.mulf %59, %56 : vector<1x4x1xf32>
    %cst_24 = arith.constant 0.000000e+00 : f32
    %61 = vector.broadcast %cst_24 : f32 to vector<1x4x1xf32>
    %62 = arith.subf %61, %33 : vector<1x4x1xf32>
    %63 = arith.mulf %62, %56 : vector<1x4x1xf32>
    %64 = vector.broadcast %58 : vector<1x4x1xf32> to vector<2x4x256xf32>
    %65 = arith.mulf %64, %15 : vector<2x4x256xf32>
    %66 = vector.broadcast %63 : vector<1x4x1xf32> to vector<2x4x256xf32>
    %67 = arith.mulf %66, %17 : vector<2x4x256xf32>
    %68 = arith.addf %65, %67 : vector<2x4x256xf32>
    %69 = vector.broadcast %63 : vector<1x4x1xf32> to vector<2x4x256xf32>
    %70 = arith.mulf %69, %15 : vector<2x4x256xf32>
    %71 = vector.broadcast %60 : vector<1x4x1xf32> to vector<2x4x256xf32>
    %72 = arith.mulf %71, %17 : vector<2x4x256xf32>
    %73 = arith.addf %70, %72 : vector<2x4x256xf32>
    %c0_25 = arith.constant 0 : index
    %c0_26 = arith.constant 0 : index
    %c0_27 = arith.constant 0 : index
    %74 = vector.load %arg3[%c0_25, %c0_26, %c0_27] : memref<1x4x1xf32, #tpu.memory_space<vmem>>, vector<1x4x1xf32>
    %c0_28 = arith.constant 0 : index
    %c0_29 = arith.constant 0 : index
    %c0_30 = arith.constant 0 : index
    %75 = vector.load %arg4[%c0_28, %c0_29, %c0_30] : memref<1x4x1xf32, #tpu.memory_space<vmem>>, vector<1x4x1xf32>
    %c0_31 = arith.constant 0 : index
    %c0_32 = arith.constant 0 : index
    %c0_33 = arith.constant 0 : index
    %76 = vector.load %arg5[%c0_31, %c0_32, %c0_33] : memref<1x4x1xf32, #tpu.memory_space<vmem>>, vector<1x4x1xf32>
    %c0_34 = arith.constant 0 : index
    %c0_35 = arith.constant 0 : index
    %c0_36 = arith.constant 0 : index
    %77 = vector.load %arg6[%c0_34, %c0_35, %c0_36] : memref<1x4x1xf32, #tpu.memory_space<vmem>>, vector<1x4x1xf32>
    %c0_37 = arith.constant 0 : index
    %c0_38 = arith.constant 0 : index
    %c0_39 = arith.constant 0 : index
    %78 = vector.load %arg7[%c0_37, %c0_38, %c0_39] : memref<1x4x1xf32, #tpu.memory_space<vmem>>, vector<1x4x1xf32>
    %79 = vector.broadcast %74 : vector<1x4x1xf32> to vector<2x4x256xf32>
    %80 = arith.mulf %68, %79 : vector<2x4x256xf32>
    %81 = vector.broadcast %75 : vector<1x4x1xf32> to vector<2x4x256xf32>
    %82 = arith.mulf %73, %81 : vector<2x4x256xf32>
    %83 = arith.addf %80, %82 : vector<2x4x256xf32>
    %84 = vector.broadcast %77 : vector<1x4x1xf32> to vector<2x4x256xf32>
    %85 = arith.addf %83, %84 : vector<2x4x256xf32>
    %c0_40 = arith.constant 0 : index
    %c0_41 = arith.constant 0 : index
    %c0_42 = arith.constant 0 : index
    %86 = vector.load %arg8[%c0_40, %c0_41, %c0_42] : memref<2x4x256xf32, #tpu.memory_space<vmem>>, vector<2x4x256xf32>
    tpu.vector_store %arg8[%c0_40, %c0_41, %c0_42], %85 {strides = array<i32>} : memref<2x4x256xf32, #tpu.memory_space<vmem>>, vector<2x4x256xf32>,
    %87 = vector.broadcast %75 : vector<1x4x1xf32> to vector<2x4x256xf32>
    %88 = arith.mulf %68, %87 : vector<2x4x256xf32>
    %89 = vector.broadcast %76 : vector<1x4x1xf32> to vector<2x4x256xf32>
    %90 = arith.mulf %73, %89 : vector<2x4x256xf32>
    %91 = arith.addf %88, %90 : vector<2x4x256xf32>
    %92 = vector.broadcast %78 : vector<1x4x1xf32> to vector<2x4x256xf32>
    %93 = arith.addf %91, %92 : vector<2x4x256xf32>
    %c0_43 = arith.constant 0 : index
    %c0_44 = arith.constant 0 : index
    %c0_45 = arith.constant 0 : index
    %94 = vector.load %arg9[%c0_43, %c0_44, %c0_45] : memref<2x4x256xf32, #tpu.memory_space<vmem>>, vector<2x4x256xf32>
    tpu.vector_store %arg9[%c0_43, %c0_44, %c0_45], %93 {strides = array<i32>} : memref<2x4x256xf32, #tpu.memory_space<vmem>>, vector<2x4x256xf32>,
    %95 = tpu.concatenate %7, %13, %26, %33, %42 in 0 : vector<1x4x1xf32>, vector<1x4x1xf32>, vector<1x4x1xf32>, vector<1x4x1xf32>, vector<1x4x1xf32> -> vector<5x4x1xf32>
    %c0_46 = arith.constant 0 : index
    %c0_47 = arith.constant 0 : index
    %c0_48 = arith.constant 0 : index
    %96 = vector.load %arg10[%c0_46, %c0_47, %c0_48] : memref<5x4x1xf32, #tpu.memory_space<vmem>>, vector<5x4x1xf32>
    tpu.vector_store %arg10[%c0_46, %c0_47, %c0_48], %95 {strides = array<i32>} : memref<5x4x1xf32, #tpu.memory_space<vmem>>, vector<5x4x1xf32>,
    return
  }
  func.func @transform_0(%arg0: i32) -> (i32, i32, i32) {
    %c0_i32 = arith.constant 0 : i32
    %c0_i32_0 = arith.constant 0 : i32
    %c0_i32_1 = arith.constant 0 : i32
    %c0_i32_2 = arith.constant 0 : i32
    return %c0_i32, %c0_i32_0, %c0_i32_1 : i32, i32, i32
  }
  func.func @transform_1(%arg0: i32) -> (i32, i32, i32) {
    %c0_i32 = arith.constant 0 : i32
    %c0_i32_0 = arith.constant 0 : i32
    %c0_i32_1 = arith.constant 0 : i32
    %c0_i32_2 = arith.constant 0 : i32
    return %c0_i32, %c0_i32_0, %c0_i32_1 : i32, i32, i32
  }
  func.func @transform_2(%arg0: i32) -> (i32, i32, i32) {
    %c0_i32 = arith.constant 0 : i32
    %c0_i32_0 = arith.constant 0 : i32
    %c0_i32_1 = arith.constant 0 : i32
    %c0_i32_2 = arith.constant 0 : i32
    return %c0_i32, %c0_i32_0, %c0_i32_1 : i32, i32, i32
  }
  func.func @transform_3(%arg0: i32) -> (i32, i32, i32) {
    %c0_i32 = arith.constant 0 : i32
    %c0_i32_0 = arith.constant 0 : i32
    %c0_i32_1 = arith.constant 0 : i32
    %c0_i32_2 = arith.constant 0 : i32
    return %c0_i32, %c0_i32_0, %c0_i32_1 : i32, i32, i32
  }
  func.func @transform_4(%arg0: i32) -> (i32, i32, i32) {
    %c0_i32 = arith.constant 0 : i32
    %c0_i32_0 = arith.constant 0 : i32
    %c0_i32_1 = arith.constant 0 : i32
    %c0_i32_2 = arith.constant 0 : i32
    return %c0_i32, %c0_i32_0, %c0_i32_1 : i32, i32, i32
  }
  func.func @transform_5(%arg0: i32) -> (i32, i32, i32) {
    %c0_i32 = arith.constant 0 : i32
    %c0_i32_0 = arith.constant 0 : i32
    %c0_i32_1 = arith.constant 0 : i32
    %c0_i32_2 = arith.constant 0 : i32
    return %c0_i32, %c0_i32_0, %c0_i32_1 : i32, i32, i32
  }
  func.func @transform_6(%arg0: i32) -> (i32, i32, i32) {
    %c0_i32 = arith.constant 0 : i32
    %c0_i32_0 = arith.constant 0 : i32
    %c0_i32_1 = arith.constant 0 : i32
    %c0_i32_2 = arith.constant 0 : i32
    return %c0_i32, %c0_i32_0, %c0_i32_1 : i32, i32, i32
  }
  func.func @transform_7(%arg0: i32) -> (i32, i32, i32) {
    %c0_i32 = arith.constant 0 : i32
    %c0_i32_0 = arith.constant 0 : i32
    %c0_i32_1 = arith.constant 0 : i32
    %c0_i32_2 = arith.constant 0 : i32
    return %c0_i32, %c0_i32_0, %c0_i32_1 : i32, i32, i32
  }
  func.func @transform_8(%arg0: i32) -> (i32, i32, i32) {
    %c0_i32 = arith.constant 0 : i32
    %c0_i32_0 = arith.constant 0 : i32
    %c0_i32_1 = arith.constant 0 : i32
    %c0_i32_2 = arith.constant 0 : i32
    return %c0_i32, %c0_i32_0, %c0_i32_1 : i32, i32, i32
  }
  func.func @transform_9(%arg0: i32) -> (i32, i32, i32) {
    %c0_i32 = arith.constant 0 : i32
    %c0_i32_0 = arith.constant 0 : i32
    %c0_i32_1 = arith.constant 0 : i32
    %c0_i32_2 = arith.constant 0 : i32
    return %c0_i32, %c0_i32_0, %c0_i32_1 : i32, i32, i32
  }
}

</mosaic_0001>

<llo_original>
// kernel: c_batchnorm2d_train.1
$region0: #{c_batchnorm2d_train.1}
  #allocation0 [shape = 'u32[]', space=smem, size = 0x4, offset = 0x4, fixed_abs, tag = 'smem constant byte address 0x4 - core index']
  #allocation1 [shape = 'u32[144,128]{1,0:T(1,128)}', space=vmem, size = 0x12000, scoped, tag = 'internal scratch']
  %s0 = inlined_call_operand.vmem [shape: f32[2,4,256], index: 0, kind: input, shape index: {}]
  %s1 = inlined_call_operand.vmem [shape: f32[2,4,256], index: 1, kind: input, shape index: {}]
  %s2 = inlined_call_operand.vmem [shape: f32[1,4,1], index: 2, kind: input, shape index: {}]
  %s3 = inlined_call_operand.vmem [shape: f32[1,4,1], index: 3, kind: input, shape index: {}]
  %s4 = inlined_call_operand.vmem [shape: f32[1,4,1], index: 4, kind: input, shape index: {}]
  %s5 = inlined_call_operand.vmem [shape: f32[1,4,1], index: 5, kind: input, shape index: {}]
  %s6 = inlined_call_operand.vmem [shape: f32[1,4,1], index: 6, kind: input, shape index: {}]
  %s7 = inlined_call_operand.vmem [shape: f32[2,4,256], index: 7, kind: output, shape index: {0}]
  %s8 = inlined_call_operand.vmem [shape: f32[2,4,256], index: 8, kind: output, shape index: {1}]
  %s9 = inlined_call_operand.vmem [shape: f32[5,4,1], index: 9, kind: output, shape index: {2}]
  %10 = xla_tuple %s7, %s8, %s9
  %s11 = sld [smem:[#allocation0]]
  $region54: #{c_batchnorm2d_train.1} parent=0
    _
  %s13 = ssub.s32 1, %s11
  %s14 = scalar_select 0, %s13, %s11
  // Predicated region
  $region2: #{c_batchnorm2d_train.1} parent=0 // pred_check
    _
  $region3: #{c_batchnorm2d_train.1} parent=0 // pred_check_branch
    %16 = sbr.rel (0) target = $region5
  $region4: #{c_batchnorm2d_train.1} parent=0 // pred_region
    _
  $region5: #{c_batchnorm2d_train.1} parent=0 // pred_fallthru
    _
  // Predicated region
  $region6: #{c_batchnorm2d_train.1} parent=0 // pred_check
    _
  $region7: #{c_batchnorm2d_train.1} parent=0 // pred_check_branch
    %18 = sbr.rel (0) target = $region9
  $region8: #{c_batchnorm2d_train.1} parent=0 // pred_region
    _
  $region9: #{c_batchnorm2d_train.1} parent=0 // pred_fallthru
    _
  // Predicated region
  $region10: #{c_batchnorm2d_train.1} parent=0 // pred_check
    _
  $region11: #{c_batchnorm2d_train.1} parent=0 // pred_check_branch
    %20 = sbr.rel (0) target = $region13
  $region12: #{c_batchnorm2d_train.1} parent=0 // pred_region
    _
  $region13: #{c_batchnorm2d_train.1} parent=0 // pred_fallthru
    _
  // Predicated region
  $region14: #{c_batchnorm2d_train.1} parent=0 // pred_check
    _
  $region15: #{c_batchnorm2d_train.1} parent=0 // pred_check_branch
    %22 = sbr.rel (0) target = $region17
  $region16: #{c_batchnorm2d_train.1} parent=0 // pred_region
    _
  $region17: #{c_batchnorm2d_train.1} parent=0 // pred_fallthru
    _
  // Predicated region
  $region18: #{c_batchnorm2d_train.1} parent=0 // pred_check
    _
  $region19: #{c_batchnorm2d_train.1} parent=0 // pred_check_branch
    %24 = sbr.rel (0) target = $region21
  $region20: #{c_batchnorm2d_train.1} parent=0 // pred_region
    _
  $region21: #{c_batchnorm2d_train.1} parent=0 // pred_fallthru
    _
  // Predicated region
  $region22: #{c_batchnorm2d_train.1} parent=0 // pred_check
    _
  $region23: #{c_batchnorm2d_train.1} parent=0 // pred_check_branch
    %26 = sbr.rel (0) target = $region25
  $region24: #{c_batchnorm2d_train.1} parent=0 // pred_region
    _
  $region25: #{c_batchnorm2d_train.1} parent=0 // pred_fallthru
    _
  // Predicated region
  $region26: #{c_batchnorm2d_train.1} parent=0 // pred_check
    _
  $region27: #{c_batchnorm2d_train.1} parent=0 // pred_check_branch
    %28 = sbr.rel (0) target = $region29
  $region28: #{c_batchnorm2d_train.1} parent=0 // pred_region
    _
  $region29: #{c_batchnorm2d_train.1} parent=0 // pred_fallthru
    _
  %v29 = vld [vmem:[%s0] sm:$0xff]
  %v30 = vld [vmem:[%s0 + $0x8] sm:$0xff]
  %v31 = vld [vmem:[%s1] sm:$0xff]
  %v32 = vld [vmem:[%s1 + $0x8] sm:$0xff]
  %v35 = vcombine.high %v29, %v29
  %v36 = vcombine.high %v30, %v30
  %vm39 = vcmask 1043456
  %v40 = vsel %vm39, %v29, 0.0
  %v41 = vsel %vm39, %v35, 0.0
  %v42 = vadd.f32 %v40, %v41
  %43 = vadd.xlane.f32.xlu0 %v42
  %v44 = vpop.xlane.xlu0 %43
  %v45 = vsel %vm39, %v30, 0.0
  %v46 = vsel %vm39, %v36, 0.0
  %v47 = vadd.f32 %v45, %v46
  %48 = vadd.xlane.f32.xlu0 %v47
  %v49 = vpop.xlane.xlu0 %48
  %v50 = vsel %vm39, %v44, 0.0
  %v51 = vsel %vm39, %v49, 0.0
  %v52 = vadd.f32 %v50, %v51
  %v53 = vmul.f32 %v52, 0.001953125
  %v56 = vcombine.high %v31, %v31
  %v57 = vcombine.high %v32, %v32
  %v60 = vsel %vm39, %v31, 0.0
  %v61 = vsel %vm39, %v56, 0.0
  %v62 = vadd.f32 %v60, %v61
  %63 = vadd.xlane.f32.xlu0 %v62
  %v64 = vpop.xlane.xlu0 %63
  %v65 = vsel %vm39, %v32, 0.0
  %v66 = vsel %vm39, %v57, 0.0
  %v67 = vadd.f32 %v65, %v66
  %68 = vadd.xlane.f32.xlu0 %v67
  %v69 = vpop.xlane.xlu0 %68
  %v70 = vsel %vm39, %v64, 0.0
  %v71 = vsel %vm39, %v69, 0.0
  %v72 = vadd.f32 %v70, %v71
  %v73 = vmul.f32 %v72, 0.001953125
  %v76 = vunpack.c.l.s4 839922192
  %v77 = vunpack.c.0.s8 %v76
  %v78 = vlaneseq
  %v79 = vshrl.u32 %v78, 7
  %v80 = vsub.s32 %v77, %v79
  %v81 = vrot.slane %v53, %v80
  %v83 = vsub.f32 %v29, %v81
  %v84 = vsub.f32 %v30, %v81
  %v87 = vunpack.c.l.s4 839922192
  %v88 = vunpack.c.0.s8 %v87
  %v89 = vlaneseq
  %v90 = vshrl.u32 %v89, 7
  %v91 = vsub.s32 %v88, %v90
  %v92 = vrot.slane %v73, %v91
  %v94 = vsub.f32 %v31, %v92
  %v95 = vsub.f32 %v32, %v92
  %v96 = vmul.f32 %v83, %v83
  %v97 = vmul.f32 %v84, %v84
  %v100 = vcombine.high %v96, %v96
  %v101 = vcombine.high %v97, %v97
  %v104 = vsel %vm39, %v96, 0.0
  %v105 = vsel %vm39, %v100, 0.0
  %v106 = vadd.f32 %v104, %v105
  %107 = vadd.xlane.f32.xlu0 %v106
  %v108 = vpop.xlane.xlu0 %107
  %v109 = vsel %vm39, %v97, 0.0
  %v110 = vsel %vm39, %v101, 0.0
  %v111 = vadd.f32 %v109, %v110
  %112 = vadd.xlane.f32.xlu0 %v111
  %v113 = vpop.xlane.xlu0 %112
  %v114 = vsel %vm39, %v108, 0.0
  %v115 = vsel %vm39, %v113, 0.0
  %v116 = vadd.f32 %v114, %v115
  %v117 = vmul.f32 %v116, 0.001953125
  %v118 = vadd.f32 %v117, 0.0001
  %v119 = vmul.f32 %v83, %v94
  %v120 = vmul.f32 %v84, %v95
  %v123 = vcombine.high %v119, %v119
  %v124 = vcombine.high %v120, %v120
  %v127 = vsel %vm39, %v119, 0.0
  %v128 = vsel %vm39, %v123, 0.0
  %v129 = vadd.f32 %v127, %v128
  %130 = vadd.xlane.f32.xlu0 %v129
  %v131 = vpop.xlane.xlu0 %130
  %v132 = vsel %vm39, %v120, 0.0
  %v133 = vsel %vm39, %v124, 0.0
  %v134 = vadd.f32 %v132, %v133
  %135 = vadd.xlane.f32.xlu0 %v134
  %v136 = vpop.xlane.xlu0 %135
  %v137 = vsel %vm39, %v131, 0.0
  %v138 = vsel %vm39, %v136, 0.0
  %v139 = vadd.f32 %v137, %v138
  %v140 = vmul.f32 %v139, 0.001953125
  %v141 = vmul.f32 %v94, %v94
  %v142 = vmul.f32 %v95, %v95
  %v145 = vcombine.high %v141, %v141
  %v146 = vcombine.high %v142, %v142
  %v149 = vsel %vm39, %v141, 0.0
  %v150 = vsel %vm39, %v145, 0.0
  %v151 = vadd.f32 %v149, %v150
  %152 = vadd.xlane.f32.xlu0 %v151
  %v153 = vpop.xlane.xlu0 %152
  %v154 = vsel %vm39, %v142, 0.0
  %v155 = vsel %vm39, %v146, 0.0
  %v156 = vadd.f32 %v154, %v155
  %157 = vadd.xlane.f32.xlu0 %v156
  %v158 = vpop.xlane.xlu0 %157
  %v159 = vsel %vm39, %v153, 0.0
  %v160 = vsel %vm39, %v158, 0.0
  %v161 = vadd.f32 %v159, %v160
  %v162 = vmul.f32 %v161, 0.001953125
  %v163 = vadd.f32 %v162, 0.0001
  %v164 = vadd.f32 %v118, %v163
  %v165 = vmul.f32 %v118, %v163
  %v166 = vmul.f32 %v140, %v140
  %v167 = vsub.f32 %v165, %v166
  %v168 = vrsqrt.pop %v167
  %v169 = vmul.f32 %v167, %v168
  %vm170 = vcmp.eq.f32.partialorder %v167, inf
  %v171 = vsel %vm170, %v167, %v169
  %vm172 = vcmp.eq.f32.partialorder %v167, 0.0
  %v173 = vand.u32 %v167, 2147483648
  %v174 = vsel %vm172, %v173, %v171
  %v175 = vmul.f32 %v174, 2.0
  %v176 = vadd.f32 %v164, %v175
  %v177 = vrsqrt.pop %v176
  %v178 = vmul.f32 %v176, %v177
  %vm179 = vcmp.eq.f32.partialorder %v176, inf
  %v180 = vsel %vm179, %v176, %v178
  %vm181 = vcmp.eq.f32.partialorder %v176, 0.0
  %v182 = vand.u32 %v176, 2147483648
  %v183 = vsel %vm181, %v182, %v180
  %v184 = vmul.f32 %v174, 1.4142135
  %v185 = vmul.f32 %v184, %v183
  %v186 = vrcp.pop %v185
  %v187 = vmul.f32 1.0, %v186
  %v188 = vadd.f32 %v163, %v174
  %v189 = vmul.f32 %v188, %v187
  %v190 = vadd.f32 %v118, %v174
  %v191 = vmul.f32 %v190, %v187
  %v192 = vsub.f32 0.0, %v140
  %v193 = vmul.f32 %v192, %v187
  %v196 = vcombine.high %v83, %v83
  %v197 = vcombine.high %v84, %v84
  %v200 = vmul.f32 %v189, %v83
  %v201 = vmul.f32 %v189, %v196
  %v202 = vmul.f32 %v189, %v84
  %v203 = vmul.f32 %v189, %v197
  %v206 = vcombine.high %v94, %v94
  %v207 = vcombine.high %v95, %v95
  %v210 = vmul.f32 %v193, %v94
  %v211 = vmul.f32 %v193, %v206
  %v212 = vmul.f32 %v193, %v95
  %v213 = vmul.f32 %v193, %v207
  %v214 = vadd.f32 %v200, %v210
  %v215 = vadd.f32 %v201, %v211
  %v216 = vadd.f32 %v202, %v212
  %v217 = vadd.f32 %v203, %v213
  %v218 = vmul.f32 %v193, %v83
  %v219 = vmul.f32 %v193, %v196
  %v220 = vmul.f32 %v193, %v84
  %v221 = vmul.f32 %v193, %v197
  %v222 = vmul.f32 %v191, %v94
  %v223 = vmul.f32 %v191, %v206
  %v224 = vmul.f32 %v191, %v95
  %v225 = vmul.f32 %v191, %v207
  %v226 = vadd.f32 %v218, %v222
  %v227 = vadd.f32 %v219, %v223
  %v228 = vadd.f32 %v220, %v224
  %v229 = vadd.f32 %v221, %v225
  %v230 = vld [vmem:[%s2] sm:$0xf]
  %v231 = vld [vmem:[%s3] sm:$0xf]
  %v232 = vld [vmem:[%s4] sm:$0xf]
  %v233 = vld [vmem:[%s5] sm:$0xf]
  %v234 = vld [vmem:[%s6] sm:$0xf]
  %236 = vset.pattern.permute.xlu0 0
  %237 = vperm.xlu0 %236, %v230
  %v238 = vpop.permute.xlu0 %237
  %v240 = vmul.f32 %v214, %v238
  %v241 = vmul.f32 %v215, %v238
  %v242 = vmul.f32 %v216, %v238
  %v243 = vmul.f32 %v217, %v238
  %245 = vset.pattern.permute.xlu0 0
  %246 = vperm.xlu0 %245, %v231
  %v247 = vpop.permute.xlu0 %246
  %v249 = vmul.f32 %v226, %v247
  %v250 = vmul.f32 %v227, %v247
  %v251 = vmul.f32 %v228, %v247
  %v252 = vmul.f32 %v229, %v247
  %v253 = vadd.f32 %v240, %v249
  %v254 = vadd.f32 %v241, %v250
  %v255 = vadd.f32 %v242, %v251
  %v256 = vadd.f32 %v243, %v252
  %258 = vset.pattern.permute.xlu0 0
  %259 = vperm.xlu0 %258, %v233
  %v260 = vpop.permute.xlu0 %259
  %v262 = vadd.f32 %v253, %v260
  %v263 = vadd.f32 %v254, %v260
  %v264 = vadd.f32 %v255, %v260
  %v265 = vadd.f32 %v256, %v260
  %v270 = vcombine.low %v262, %v263
  %v271 = vcombine.low %v264, %v265
  %274 = vst [vmem:[%s7] sm:$0xff] %v270
  %275 = vst [vmem:[%s7 + $0x8] sm:$0xff] %v271
  %v276 = vmul.f32 %v214, %v247
  %v277 = vmul.f32 %v215, %v247
  %v278 = vmul.f32 %v216, %v247
  %v279 = vmul.f32 %v217, %v247
  %281 = vset.pattern.permute.xlu0 0
  %282 = vperm.xlu0 %281, %v232
  %v283 = vpop.permute.xlu0 %282
  %v285 = vmul.f32 %v226, %v283
  %v286 = vmul.f32 %v227, %v283
  %v287 = vmul.f32 %v228, %v283
  %v288 = vmul.f32 %v229, %v283
  %v289 = vadd.f32 %v276, %v285
  %v290 = vadd.f32 %v277, %v286
  %v291 = vadd.f32 %v278, %v287
  %v292 = vadd.f32 %v279, %v288
  %294 = vset.pattern.permute.xlu0 0
  %295 = vperm.xlu0 %294, %v234
  %v296 = vpop.permute.xlu0 %295
  %v298 = vadd.f32 %v289, %v296
  %v299 = vadd.f32 %v290, %v296
  %v300 = vadd.f32 %v291, %v296
  %v301 = vadd.f32 %v292, %v296
  %v306 = vcombine.low %v298, %v299
  %v307 = vcombine.low %v300, %v301
  %310 = vst [vmem:[%s8] sm:$0xff] %v306
  %311 = vst [vmem:[%s8 + $0x8] sm:$0xff] %v307
  %vm312 = vcmask 3072
  %313 = vst.msk [vmem:[%s9] sm:$0xf] %vm312, %v53
  %314 = vst.msk [vmem:[%s9 + $0x4] sm:$0xf] %vm312, %v73
  %315 = vst.msk [vmem:[%s9 + $0x8] sm:$0xf] %vm312, %v118
  %316 = vst.msk [vmem:[%s9 + $0xc] sm:$0xf] %vm312, %v140
  %317 = vst.msk [vmem:[%s9 + $0x10] sm:$0xf] %vm312, %v163
  // Predicated region
  $region30: #{c_batchnorm2d_train.1} parent=0 // pred_check
    _
  $region31: #{c_batchnorm2d_train.1} parent=0 // pred_check_branch
    %319 = sbr.rel (0) target = $region33
  $region32: #{c_batchnorm2d_train.1} parent=0 // pred_region
    _
  $region33: #{c_batchnorm2d_train.1} parent=0 // pred_fallthru
    _
  // Predicated region
  $region34: #{c_batchnorm2d_train.1} parent=0 // pred_check
    _
  $region35: #{c_batchnorm2d_train.1} parent=0 // pred_check_branch
    %321 = sbr.rel (0) target = $region37
  $region36: #{c_batchnorm2d_train.1} parent=0 // pred_region
    _
  $region37: #{c_batchnorm2d_train.1} parent=0 // pred_fallthru
    _
  // Predicated region
  $region38: #{c_batchnorm2d_train.1} parent=0 // pred_check
    _
  $region39: #{c_batchnorm2d_train.1} parent=0 // pred_check_branch
    %323 = sbr.rel (0) target = $region41
  $region40: #{c_batchnorm2d_train.1} parent=0 // pred_region
    _
  $region41: #{c_batchnorm2d_train.1} parent=0 // pred_fallthru
    _
  // Predicated region
  $region42: #{c_batchnorm2d_train.1} parent=0 // pred_check
    _
  $region43: #{c_batchnorm2d_train.1} parent=0 // pred_check_branch
    %325 = sbr.rel (0) target = $region45
  $region44: #{c_batchnorm2d_train.1} parent=0 // pred_region
    _
  $region45: #{c_batchnorm2d_train.1} parent=0 // pred_fallthru
    _
  // Predicated region
  $region46: #{c_batchnorm2d_train.1} parent=0 // pred_check
    _
  $region47: #{c_batchnorm2d_train.1} parent=0 // pred_check_branch
    %327 = sbr.rel (0) target = $region49
  $region48: #{c_batchnorm2d_train.1} parent=0 // pred_region
    _
  $region49: #{c_batchnorm2d_train.1} parent=0 // pred_fallthru
    _
  // Predicated region
  $region50: #{c_batchnorm2d_train.1} parent=0 // pred_check
    _
  $region51: #{c_batchnorm2d_train.1} parent=0 // pred_check_branch
    %329 = sbr.rel (0) target = $region53
  $region52: #{c_batchnorm2d_train.1} parent=0 // pred_region
    _
  $region53: #{c_batchnorm2d_train.1} parent=0 // pred_fallthru
    _

</llo_original>
